<compile_context>
chip_gen: v7x
topology: tpu7x:2x2x1
jax: 0.10.0
libtpu: 0.0.40
codegen_flags: <defaults>
</compile_context>

<pallas_src>
import functools

import jax
import jax.numpy as jnp
from jax import lax
from jax.experimental import pallas as pl
from jax.experimental.pallas import tpu as pltpu


# --------------------------------------------------------------------------- #
# Kernel bodies
# --------------------------------------------------------------------------- #
def _logsoftmax_pair(xa, xb, *, use_log1p):
    """Closed-form, numerically stable log_softmax over a 2-element axis.

    out_a = -softplus(xb - xa) = min(d, 0) - log1p(exp(-|d|)),  d = xa - xb
    out_b = -softplus(xa - xb) = min(-d, 0) - log1p(exp(-|d|))
    One EUP exp + one EUP log per lane pair.
    """
    d = xa - xb
    t = jnp.exp(-jnp.abs(d))
    e = jnp.log1p(t) if use_log1p else jnp.log(1.0 + t)
    out_a = jnp.minimum(d, 0.0) - e
    out_b = jnp.minimum(-d, 0.0) - e
    return out_a, out_b


def _kernel_fused(x_ref, o_ref, *, s_tile):
    # x_ref: (b_tile, 2, s_tile) block of x1 (B, 2, S)
    # o_ref: (b_tile, 2*s_tile) block of the flat output (B, 2*S) == (B, S, 2)
    xa = x_ref[:, 0, :]                      # (b_tile, s_tile), dense lanes
    xb = x_ref[:, 1, :]
    out_a, out_b = _logsoftmax_pair(xa, xb, use_log1p=True)

    # Lane interleave [a0 b0 a1 b1 ...] via 0/1 selector matmuls (MXU is idle
    # in this kernel; the selectors route each value to exactly one column, so
    # the result is exact).  Note: only lanes mix in the dot, so padded rows of
    # a partial batch block can never contaminate valid rows.
    row = lax.broadcasted_iota(jnp.int32, (s_tile, 2 * s_tile), 0)
    col = lax.broadcasted_iota(jnp.int32, (s_tile, 2 * s_tile), 1)
    sel_even = (col == 2 * row).astype(jnp.float32)
    sel_odd = (col == 2 * row + 1).astype(jnp.float32)
    out = (jnp.dot(out_a.astype(jnp.float32), sel_even,
                   preferred_element_type=jnp.float32)
           + jnp.dot(out_b.astype(jnp.float32), sel_odd,
                     preferred_element_type=jnp.float32))
    o_ref[...] = out.astype(o_ref.dtype)     # single dense, unmasked store


def _kernel_split(x_ref, oa_ref, ob_ref):
    # Fallback path: two dense (b_tile, s_tile) outputs, interleave left to XLA.
    xa = x_ref[:, 0, :]
    xb = x_ref[:, 1, :]
    out_a, out_b = _logsoftmax_pair(xa, xb, use_log1p=False)
    oa_ref[...] = out_a.astype(oa_ref.dtype)
    ob_ref[...] = out_b.astype(ob_ref.dtype)


# --------------------------------------------------------------------------- #
# Tiling plan
# --------------------------------------------------------------------------- #
_MAX_FUSED_S_TILE = 128      # keeps the interleave matmul under the HBM roofline
_MAX_SPLIT_S_TILE = 2048     # lane tile without MXU cost concerns
_PAYLOAD_BYTES = 1 << 20     # ~1 MiB of real in+out data per grid step


def _plan(B, S, *, fused):
    """Pick (b_tile, s_tile, shape_ok) for the given layout.

    Per-step VMEM (double buffered): input block padded 2->8 sublanes
    (32*b*s bytes) + output (8*b*s bytes) ~= 5 MiB at b*s = 64K: safe for
    v5e (16 MiB scoped default), v6e (32 MiB) and v7x (64 MiB physical).
    """
    if fused:
        s_tile = S if S <= _MAX_FUSED_S_TILE else _MAX_FUSED_S_TILE
        # The interleave dot mixes lanes, so refuse lane padding (keeps NaNs
        # from padded lanes out of valid outputs); rows may still be padded.
        shape_ok = (S % s_tile == 0)
    else:
        s_tile = S if S <= _MAX_SPLIT_S_TILE else _MAX_SPLIT_S_TILE
        shape_ok = True
    rows_target = max(8, _PAYLOAD_BYTES // (16 * s_tile))   # 16 B per (row, s)
    b_tile = B if B <= rows_target else (rows_target // 8) * 8
    return b_tile, s_tile, shape_ok


# --------------------------------------------------------------------------- #
# pallas_call wrappers
# --------------------------------------------------------------------------- #
def _forward(x1, *, fused):
    B, C, S = x1.shape
    assert C == 2, "module is Linear(2, 2): channel axis of x1 must be 2"

    if fused:
        b_tile, s_tile, ok = _plan(B, S, fused=True)
        fused = ok
    if not fused:
        b_tile, s_tile, _ = _plan(B, S, fused=False)

    grid = (pl.cdiv(B, b_tile), pl.cdiv(S, s_tile))
    in_specs = [pl.BlockSpec((b_tile, 2, s_tile), lambda i, j: (i, 0, j))]
    cparams = pltpu.CompilerParams(
        dimension_semantics=("parallel", "parallel"))

    if fused:
        out_flat = pl.pallas_call(
            functools.partial(_kernel_fused, s_tile=s_tile),
            out_shape=jax.ShapeDtypeStruct((B, 2 * S), x1.dtype),
            grid=grid,
            in_specs=in_specs,
            out_specs=pl.BlockSpec((b_tile, 2 * s_tile), lambda i, j: (i, j)),
            compiler_params=cparams,
        )(x1)
        # (B, 2*S) -> (B, S, 2) is the row-major flat view: free metadata reshape.
        return out_flat.reshape(B, S, 2)

    out_a, out_b = pl.pallas_call(
        _kernel_split,
        out_shape=(jax.ShapeDtypeStruct((B, S), x1.dtype),
                   jax.ShapeDtypeStruct((B, S), x1.dtype)),
        grid=grid,
        in_specs=in_specs,
        out_specs=(pl.BlockSpec((b_tile, s_tile), lambda i, j: (i, j)),
                   pl.BlockSpec((b_tile, s_tile), lambda i, j: (i, j))),
        compiler_params=cparams,
    )(x1)
    # Fallback: one XLA interleave pass produces the (B, S, 2) result.
    return jnp.stack([out_a, out_b], axis=-1)


# One-time runtime probe: verify the fused (permute-in-kernel) path numerically
# on tiny inputs; if it fails to lower or is not bit-accurate enough on this
# toolchain/chip, silently use the conservative split path.
_FUSED_OK = None


def _fused_path_ok():
    global _FUSED_OK
    if _FUSED_OK is None:
        ok = True
        try:
            key = jax.random.PRNGKey(42)
            for (b, s) in ((2, 8), (4, 256)):
                x = jax.random.normal(jax.random.fold_in(key, s),
                                      (b, 2, s), jnp.float32)
                got = _forward(x, fused=True)
                want = jax.nn.log_softmax(jnp.transpose(x, (0, 2, 1)), axis=-1)
                if not bool(jnp.allclose(got, want, atol=1e-5, rtol=1e-5)):
                    ok = False
                    break
        except Exception:
            ok = False
        _FUSED_OK = ok
    return _FUSED_OK


def model_forward(x1):
    """x1: (B, 2, S) float32.

    Returns log_softmax(x1.permute(0, 2, 1), axis=-1) with shape (B, S, 2),
    matching the module's return value.  The module's Linear(2, 2) output is
    dead code (never returned) and is intentionally not computed.
    """
    return _forward(x1, fused=_fused_path_ok())


def _reference(x1):
    v1 = jnp.transpose(x1, (0, 2, 1))
    return jax.nn.log_softmax(v1, axis=-1)


if __name__ == "__main__":
    key = jax.random.PRNGKey(0)

    # Small shapes consistent with the module: Linear(2, 2) -> channel axis = 2.
    for (B, S) in ((2, 8), (4, 256)):
        x1 = jax.random.normal(jax.random.fold_in(key, S), (B, 2, S),
                               dtype=jnp.float32)
        out = jax.block_until_ready(model_forward(x1))
        ref = _reference(x1)
        assert out.shape == (B, S, 2), out.shape
        assert jnp.allclose(out, ref, atol=1e-5, rtol=1e-5), \
            f"mismatch vs reference at B={B}, S={S}"

    print("KERNEL_OK")
</pallas_src>

<mosaic_0001>
module attributes {stable_mosaic.version = 11 : i64} {
  func.func @_kernel_fused(%arg0: i32, %arg1: i32, %arg2: memref<2x2x8xf32, #tpu.memory_space<vmem>>, %arg3: memref<2x16xf32, #tpu.memory_space<vmem>>) attributes {dimension_semantics = [#tpu.dimension_semantics<parallel>, #tpu.dimension_semantics<parallel>], iteration_bounds = array<i64: 1, 1>, scalar_prefetch = 0 : i64, scratch_operands = 0 : i64, tpu.core_type = #tpu.core_type<tc>, window_params = [{transform_indices = @transform_0, window_bounds = array<i64: 2, 2, 8>}, {transform_indices = @transform_1, window_bounds = array<i64: 2, 16>}]} {
    %c0 = arith.constant 0 : index
    %c0_0 = arith.constant 0 : index
    %c0_1 = arith.constant 0 : index
    %0 = vector.load %arg2[%c0, %c0_0, %c0_1] : memref<2x2x8xf32, #tpu.memory_space<vmem>>, vector<2x1x8xf32>
    %1 = vector.shape_cast %0 : vector<2x1x8xf32> to vector<2x8xf32>
    %c0_2 = arith.constant 0 : index
    %c1 = arith.constant 1 : index
    %c0_3 = arith.constant 0 : index
    %2 = vector.load %arg2[%c0_2, %c1, %c0_3] : memref<2x2x8xf32, #tpu.memory_space<vmem>>, vector<2x1x8xf32>
    %3 = vector.shape_cast %2 : vector<2x1x8xf32> to vector<2x8xf32>
    %4 = arith.subf %1, %3 : vector<2x8xf32>
    %5 = math.absf %4 : vector<2x8xf32>
    %cst = arith.constant 0.000000e+00 : f32
    %6 = vector.broadcast %cst : f32 to vector<2x8xf32>
    %7 = arith.subf %6, %5 : vector<2x8xf32>
    %8 = math.exp %7 : vector<2x8xf32>
    %9 = math.log1p %8 : vector<2x8xf32>
    %cst_4 = arith.constant 0.000000e+00 : f32
    %10 = vector.broadcast %cst_4 : f32 to vector<2x8xf32>
    %11 = arith.minimumf %4, %10 : vector<2x8xf32>
    %12 = arith.subf %11, %9 : vector<2x8xf32>
    %cst_5 = arith.constant 0.000000e+00 : f32
    %13 = vector.broadcast %cst_5 : f32 to vector<2x8xf32>
    %14 = arith.subf %13, %4 : vector<2x8xf32>
    %cst_6 = arith.constant 0.000000e+00 : f32
    %15 = vector.broadcast %cst_6 : f32 to vector<2x8xf32>
    %16 = arith.minimumf %14, %15 : vector<2x8xf32>
    %17 = arith.subf %16, %9 : vector<2x8xf32>
    %18 = tpu.iota {dimensions = array<i32: 0>} : vector<8x16xi32>
    %19 = tpu.iota {dimensions = array<i32: 1>} : vector<8x16xi32>
    %c2_i32 = arith.constant 2 : i32
    %20 = vector.broadcast %c2_i32 : i32 to vector<8x16xi32>
    %21 = arith.muli %20, %18 : vector<8x16xi32>
    %22 = arith.cmpi eq, %19, %21 : vector<8x16xi32>
    %23 = arith.extui %22 : vector<8x16xi1> to vector<8x16xi32>
    %24 = arith.sitofp %23 : vector<8x16xi32> to vector<8x16xf32>
    %c2_i32_7 = arith.constant 2 : i32
    %25 = vector.broadcast %c2_i32_7 : i32 to vector<8x16xi32>
    %26 = arith.muli %25, %18 : vector<8x16xi32>
    %c1_i32 = arith.constant 1 : i32
    %27 = vector.broadcast %c1_i32 : i32 to vector<8x16xi32>
    %28 = arith.addi %26, %27 : vector<8x16xi32>
    %29 = arith.cmpi eq, %19, %28 : vector<8x16xi32>
    %30 = arith.extui %29 : vector<8x16xi1> to vector<8x16xi32>
    %31 = arith.sitofp %30 : vector<8x16xi32> to vector<8x16xf32>
    %cst_8 = arith.constant dense<0.000000e+00> : vector<2x16xf32>
    %32 = tpu.matmul %12, %24, %cst_8 {dimension_numbers = #tpu.dot_dimension_numbers<[1], [0], [0], [1], [0, 0, 1, 1], [], []>} : vector<2x8xf32>, vector<8x16xf32>, vector<2x16xf32> -> vector<2x16xf32>
    %cst_9 = arith.constant dense<0.000000e+00> : vector<2x16xf32>
    %33 = tpu.matmul %17, %31, %cst_9 {dimension_numbers = #tpu.dot_dimension_numbers<[1], [0], [0], [1], [0, 0, 1, 1], [], []>} : vector<2x8xf32>, vector<8x16xf32>, vector<2x16xf32> -> vector<2x16xf32>
    %34 = arith.addf %32, %33 : vector<2x16xf32>
    %c0_10 = arith.constant 0 : index
    %c0_11 = arith.constant 0 : index
    %35 = vector.load %arg3[%c0_10, %c0_11] : memref<2x16xf32, #tpu.memory_space<vmem>>, vector<2x16xf32>
    tpu.vector_store %arg3[%c0_10, %c0_11], %34 {strides = array<i32>} : memref<2x16xf32, #tpu.memory_space<vmem>>, vector<2x16xf32>,
    return
  }
  func.func @transform_0(%arg0: i32, %arg1: i32) -> (i32, i32, i32) {
    %c0_i32 = arith.constant 0 : i32
    %c0_i32_0 = arith.constant 0 : i32
    return %arg0, %c0_i32, %arg1 : i32, i32, i32
  }
  func.func @transform_1(%arg0: i32, %arg1: i32) -> (i32, i32) {
    %c0_i32 = arith.constant 0 : i32
    return %arg0, %arg1 : i32, i32
  }
}

module attributes {stable_mosaic.version = 11 : i64} {
  func.func @_kernel_split(%arg0: i32, %arg1: i32, %arg2: memref<2x2x8xf32, #tpu.memory_space<vmem>>, %arg3: memref<2x8xf32, #tpu.memory_space<vmem>>, %arg4: memref<2x8xf32, #tpu.memory_space<vmem>>) attributes {dimension_semantics = [#tpu.dimension_semantics<parallel>, #tpu.dimension_semantics<parallel>], iteration_bounds = array<i64: 1, 1>, scalar_prefetch = 0 : i64, scratch_operands = 0 : i64, tpu.core_type = #tpu.core_type<tc>, window_params = [{transform_indices = @transform_0, window_bounds = array<i64: 2, 2, 8>}, {transform_indices = @transform_1, window_bounds = array<i64: 2, 8>}, {transform_indices = @transform_2, window_bounds = array<i64: 2, 8>}]} {
    %c0 = arith.constant 0 : index
    %c0_0 = arith.constant 0 : index
    %c0_1 = arith.constant 0 : index
    %0 = vector.load %arg2[%c0, %c0_0, %c0_1] : memref<2x2x8xf32, #tpu.memory_space<vmem>>, vector<2x1x8xf32>
    %1 = vector.shape_cast %0 : vector<2x1x8xf32> to vector<2x8xf32>
    %c0_2 = arith.constant 0 : index
    %c1 = arith.constant 1 : index
    %c0_3 = arith.constant 0 : index
    %2 = vector.load %arg2[%c0_2, %c1, %c0_3] : memref<2x2x8xf32, #tpu.memory_space<vmem>>, vector<2x1x8xf32>
    %3 = vector.shape_cast %2 : vector<2x1x8xf32> to vector<2x8xf32>
    %4 = arith.subf %1, %3 : vector<2x8xf32>
    %5 = math.absf %4 : vector<2x8xf32>
    %cst = arith.constant 0.000000e+00 : f32
    %6 = vector.broadcast %cst : f32 to vector<2x8xf32>
    %7 = arith.subf %6, %5 : vector<2x8xf32>
    %8 = math.exp %7 : vector<2x8xf32>
    %cst_4 = arith.constant 1.000000e+00 : f32
    %9 = vector.broadcast %cst_4 : f32 to vector<2x8xf32>
    %10 = arith.addf %9, %8 : vector<2x8xf32>
    %11 = math.log %10 : vector<2x8xf32>
    %cst_5 = arith.constant 0.000000e+00 : f32
    %12 = vector.broadcast %cst_5 : f32 to vector<2x8xf32>
    %13 = arith.minimumf %4, %12 : vector<2x8xf32>
    %14 = arith.subf %13, %11 : vector<2x8xf32>
    %cst_6 = arith.constant 0.000000e+00 : f32
    %15 = vector.broadcast %cst_6 : f32 to vector<2x8xf32>
    %16 = arith.subf %15, %4 : vector<2x8xf32>
    %cst_7 = arith.constant 0.000000e+00 : f32
    %17 = vector.broadcast %cst_7 : f32 to vector<2x8xf32>
    %18 = arith.minimumf %16, %17 : vector<2x8xf32>
    %19 = arith.subf %18, %11 : vector<2x8xf32>
    %c0_8 = arith.constant 0 : index
    %c0_9 = arith.constant 0 : index
    %20 = vector.load %arg3[%c0_8, %c0_9] : memref<2x8xf32, #tpu.memory_space<vmem>>, vector<2x8xf32>
    tpu.vector_store %arg3[%c0_8, %c0_9], %14 {strides = array<i32>} : memref<2x8xf32, #tpu.memory_space<vmem>>, vector<2x8xf32>,
    %c0_10 = arith.constant 0 : index
    %c0_11 = arith.constant 0 : index
    %21 = vector.load %arg4[%c0_10, %c0_11] : memref<2x8xf32, #tpu.memory_space<vmem>>, vector<2x8xf32>
    tpu.vector_store %arg4[%c0_10, %c0_11], %19 {strides = array<i32>} : memref<2x8xf32, #tpu.memory_space<vmem>>, vector<2x8xf32>,
    return
  }
  func.func @transform_0(%arg0: i32, %arg1: i32) -> (i32, i32, i32) {
    %c0_i32 = arith.constant 0 : i32
    %c0_i32_0 = arith.constant 0 : i32
    return %arg0, %c0_i32, %arg1 : i32, i32, i32
  }
  func.func @transform_1(%arg0: i32, %arg1: i32) -> (i32, i32) {
    %c0_i32 = arith.constant 0 : i32
    return %arg0, %arg1 : i32, i32
  }
  func.func @transform_2(%arg0: i32, %arg1: i32) -> (i32, i32) {
    %c0_i32 = arith.constant 0 : i32
    return %arg0, %arg1 : i32, i32
  }
}

</mosaic_0001>

<llo_original>
// kernel: tpu_custom_call.1
$region0: #{tpu_custom_call.1}
  #allocation0 [shape = 'u32[]', space=smem, size = 0x4, offset = 0x4, fixed_abs, tag = 'smem constant byte address 0x4 - core index']
  #allocation1 [shape = 'u32[144,128]{1,0:T(1,128)}', space=vmem, size = 0x12000, scoped, tag = 'internal scratch']
  %s0 = inlined_call_operand.hbm [shape: f32[2,2,8], index: 0, kind: input, shape index: {}]
  %s1 = inlined_call_operand.hbm [shape: f32[2,16], index: 1, kind: output, shape index: {}]
  %s2 = sld [smem:[#allocation0]]
  $region18: #{tpu_custom_call.1} parent=0
    _
  %s4 = ssub.s32 1, %s2
  %s5 = scalar_select 0, %s4, %s2
  $region1: #{tpu_custom_call.1} parent=0
    #allocation2 [shape = 'u8[2048]{0}', space=vmem, size = 0x800, scoped, tag = 'input window, operand 0, single buffered']
    #allocation3 [shape = 's32[1]{0}', space=sflag, size = 0x4, scoped, tag = 'scoped memory for tpu_custom_call.1']
    #allocation4 [shape = 's32[1]{0}', space=sflag, size = 0x4, scoped, tag = 'scoped memory for tpu_custom_call.1']
    #allocation5 [shape = 'u8[1024]{0}', space=vmem, size = 0x400, scoped, tag = 'output window, operand 0, single buffered']
    %6 = vsyncpa [#allocation3], 0
    %7 = vsyncpa [#allocation4], 0
    // Predicated region
    $region2: #{tpu_custom_call.1} parent=1 // pred_check
      _
    $region3: #{tpu_custom_call.1} parent=1 // pred_check_branch
      %9 = sbr.rel (0) target = $region5
    $region4: #{tpu_custom_call.1} parent=1 // pred_region
      %s11 = ssub.s32 64, 64
      %12 = vsyncadd [#allocation3], %s11
      %s13 = sshll.u32 [#allocation2], 4
      %s14 = int_to_ptr.vmem [resolvable:$true] %s13
      %19 = dma.hbm_to_vmem [thread:$0]  %s0, 64, %s14, [#allocation3], 32, 32, 2
    $region5: #{tpu_custom_call.1} parent=1 // pred_fallthru
      _
    // Predicated region
    $region6: #{tpu_custom_call.1} parent=1 // pred_check
      _
    $region7: #{tpu_custom_call.1} parent=1 // pred_check_branch
      %21 = sbr.rel (0) target = $region9
    $region8: #{tpu_custom_call.1} parent=1 // pred_region
      %22 = dma.done [#allocation3], 64
    $region9: #{tpu_custom_call.1} parent=1 // pred_fallthru
      _
    %v23 = vld [vmem:[#allocation2] sm:$0x1]
    %v24 = vld [vmem:[#allocation2 + $0x2] sm:$0x1]
    %v25 = vld [vmem:[#allocation2 + $0x1] sm:$0x1]
    %v26 = vld [vmem:[#allocation2 + $0x3] sm:$0x1]
    %v27 = vsub.f32 %v23, %v25
    %v28 = vsub.f32 %v24, %v26
    %v29 = vand.u32 2147483647, %v27
    %v30 = vand.u32 2147483647, %v28
    %v31 = vsub.f32 0.0, %v29
    %v32 = vsub.f32 0.0, %v30
    %v33 = vmul.f32 %v31, 1.442695
    %v34 = vpow.pop %v33
    %v35 = vmul.f32 %v32, 1.442695
    %v36 = vpow.pop %v35
    %v37 = vadd.f32 %v34, 1.0
    %v38 = vlog2.pop %v37
    %v39 = vmul.f32 %v38, 0.6931472
    %v40 = vmul.f32 -0.5, %v34
    %v41 = vadd.f32 %v40, 1.0
    %v42 = vmul.f32 %v41, %v34
    %v43 = vand.u32 2147483647, %v34
    %vm44 = vcmp.lt.f32.partialorder %v43, 0.0004427343
    %v45 = vsel %vm44, %v42, %v39
    %v46 = vadd.f32 %v36, 1.0
    %v47 = vlog2.pop %v46
    %v48 = vmul.f32 %v47, 0.6931472
    %v49 = vmul.f32 -0.5, %v36
    %v50 = vadd.f32 %v49, 1.0
    %v51 = vmul.f32 %v50, %v36
    %v52 = vand.u32 2147483647, %v36
    %vm53 = vcmp.lt.f32.partialorder %v52, 0.0004427343
    %v54 = vsel %vm53, %v51, %v48
    %v55 = vmin.f32 %v27, 0.0
    %v56 = vmin.f32 %v28, 0.0
    %v57 = vsub.f32 %v55, %v45
    %v58 = vsub.f32 %v56, %v54
    %v59 = vsub.f32 0.0, %v27
    %v60 = vsub.f32 0.0, %v28
    %v61 = vmin.f32 %v59, 0.0
    %v62 = vmin.f32 %v60, 0.0
    %v63 = vsub.f32 %v61, %v45
    %v64 = vsub.f32 %v62, %v54
    %v65 = vlaneseq
    %v66 = vshrl.u32 %v65, 7
    %v67 = vlaneseq
    %v68 = vand.u32 %v67, 127
    %v69 = vmul.u32 %v66, 2
    %vm70 = vcmp.eq.s32.totalorder %v68, %v69
    %v71 = vsel %vm70, 1, 0
    %v72 = vcvt.s32.f32 %v71
    %v73 = vadd.s32 %v69, 1
    %vm74 = vcmp.eq.s32.totalorder %v68, %v73
    %v75 = vsel %vm74, 1, 0
    %v76 = vcvt.s32.f32 %v75
    %v79 = vrot.slane %v64, 7
    %vm80 = vcmask 1041409
    %v81 = vsel %vm80, %v79, %v63
    %vm82 = vcmask 64512
    %v83 = vsel %vm82, %v81, 0
    %85 = vmatprep.subr.mxu0 0.0
    %86 = vmatpush1.msra.mxu0 %v76
    %87 = vmatprep.subr.mxu0 0.0
    %88 = vmatpush1.msra.mxu0 0.0
    %89 = vmatprep.subr.mxu0 0.0
    %90 = vmatpush1.msra.mxu0 0.0
    %91 = vmatprep.subr.mxu0 0.0
    %92 = vmatpush1.msra.mxu0 0.0
    %93 = vmatprep.subr.mxu0 0.0
    %94 = vmatpush1.msra.mxu0 0.0
    %95 = vmatprep.subr.mxu0 0.0
    %96 = vmatpush1.msra.mxu0 0.0
    %97 = vmatprep.subr.mxu0 0.0
    %98 = vmatpush1.msra.mxu0 0.0
    %99 = vmatprep.subr.mxu0 0.0
    %100 = vmatpush1.msra.mxu0 0.0
    %101 = vmatprep.subr.mxu0 0.0
    %102 = vmatpush1.msra.mxu0 0.0
    %103 = vmatprep.subr.mxu0 0.0
    %104 = vmatpush1.msra.mxu0 0.0
    %105 = vmatprep.subr.mxu0 0.0
    %106 = vmatpush1.msra.mxu0 0.0
    %107 = vmatprep.subr.mxu0 0.0
    %108 = vmatpush1.msra.mxu0 0.0
    %109 = vmatprep.subr.mxu0 0.0
    %110 = vmatpush1.msra.mxu0 0.0
    %111 = vmatprep.subr.mxu0 0.0
    %112 = vmatpush1.msra.mxu0 0.0
    %113 = vmatprep.subr.mxu0 0.0
    %114 = vmatpush1.msra.mxu0 0.0
    %115 = vmatprep.subr.mxu0 0.0
    %116 = vmatpush1.msra.mxu0 0.0
    %117 = vmatprep.subr.mxu0 0.0
    %118 = vmatpush1.msra.mxu0 0.0
    %119 = vmatprep.subr.mxu0 0.0
    %120 = vmatpush1.msra.mxu0 0.0
    %121 = vmatprep.subr.mxu0 0.0
    %122 = vmatpush1.msra.mxu0 0.0
    %123 = vmatprep.subr.mxu0 0.0
    %124 = vmatpush1.msra.mxu0 0.0
    %125 = vmatprep.subr.mxu0 0.0
    %126 = vmatpush1.msra.mxu0 0.0
    %127 = vmatprep.subr.mxu0 0.0
    %128 = vmatpush1.msra.mxu0 0.0
    %129 = vmatprep.subr.mxu0 0.0
    %130 = vmatpush1.msra.mxu0 0.0
    %131 = vmatprep.subr.mxu0 0.0
    %132 = vmatpush1.msra.mxu0 0.0
    %133 = vmatprep.subr.mxu0 0.0
    %134 = vmatpush1.msra.mxu0 0.0
    %135 = vmatprep.subr.mxu0 0.0
    %136 = vmatpush1.msra.mxu0 0.0
    %137 = vmatprep.subr.mxu0 0.0
    %138 = vmatpush1.msra.mxu0 0.0
    %139 = vmatprep.subr.mxu0 0.0
    %140 = vmatpush1.msra.mxu0 0.0
    %141 = vmatprep.subr.mxu0 0.0
    %142 = vmatpush1.msra.mxu0 0.0
    %143 = vmatprep.subr.mxu0 0.0
    %144 = vmatpush1.msra.mxu0 0.0
    %145 = vmatprep.subr.mxu0 0.0
    %146 = vmatpush1.msra.mxu0 0.0
    %147 = vmatprep.subr.mxu0 0.0
    %148 = vmatpush1.msra.mxu0 0.0
    %149 = vmatprep.mubr.f32.mxu0 0.0
    %150 = vmatmul.mubr.f32.gmra.mrb[0].mxu0 %v83
    %v151 = vpop.f32.mrb[0].mxu0
    %v152 = vadd.f32 0.0, %v151
    %v153 = vpop.f32.mrb[0].mxu0
    %154 = vdwg.mxu0
    %v157 = vrot.slane %v58, 7
    %v158 = vsel %vm80, %v157, %v57
    %v159 = vsel %vm82, %v158, 0
    %161 = vmatprep.subr.mxu0 0.0
    %162 = vmatpush1.msra.mxu0 %v72
    %163 = vmatprep.subr.mxu0 0.0
    %164 = vmatpush1.msra.mxu0 0.0
    %165 = vmatprep.subr.mxu0 0.0
    %166 = vmatpush1.msra.mxu0 0.0
    %167 = vmatprep.subr.mxu0 0.0
    %168 = vmatpush1.msra.mxu0 0.0
    %169 = vmatprep.subr.mxu0 0.0
    %170 = vmatpush1.msra.mxu0 0.0
    %171 = vmatprep.subr.mxu0 0.0
    %172 = vmatpush1.msra.mxu0 0.0
    %173 = vmatprep.subr.mxu0 0.0
    %174 = vmatpush1.msra.mxu0 0.0
    %175 = vmatprep.subr.mxu0 0.0
    %176 = vmatpush1.msra.mxu0 0.0
    %177 = vmatprep.subr.mxu0 0.0
    %178 = vmatpush1.msra.mxu0 0.0
    %179 = vmatprep.subr.mxu0 0.0
    %180 = vmatpush1.msra.mxu0 0.0
    %181 = vmatprep.subr.mxu0 0.0
    %182 = vmatpush1.msra.mxu0 0.0
    %183 = vmatprep.subr.mxu0 0.0
    %184 = vmatpush1.msra.mxu0 0.0
    %185 = vmatprep.subr.mxu0 0.0
    %186 = vmatpush1.msra.mxu0 0.0
    %187 = vmatprep.subr.mxu0 0.0
    %188 = vmatpush1.msra.mxu0 0.0
    %189 = vmatprep.subr.mxu0 0.0
    %190 = vmatpush1.msra.mxu0 0.0
    %191 = vmatprep.subr.mxu0 0.0
    %192 = vmatpush1.msra.mxu0 0.0
    %193 = vmatprep.subr.mxu0 0.0
    %194 = vmatpush1.msra.mxu0 0.0
    %195 = vmatprep.subr.mxu0 0.0
    %196 = vmatpush1.msra.mxu0 0.0
    %197 = vmatprep.subr.mxu0 0.0
    %198 = vmatpush1.msra.mxu0 0.0
    %199 = vmatprep.subr.mxu0 0.0
    %200 = vmatpush1.msra.mxu0 0.0
    %201 = vmatprep.subr.mxu0 0.0
    %202 = vmatpush1.msra.mxu0 0.0
    %203 = vmatprep.subr.mxu0 0.0
    %204 = vmatpush1.msra.mxu0 0.0
    %205 = vmatprep.subr.mxu0 0.0
    %206 = vmatpush1.msra.mxu0 0.0
    %207 = vmatprep.subr.mxu0 0.0
    %208 = vmatpush1.msra.mxu0 0.0
    %209 = vmatprep.subr.mxu0 0.0
    %210 = vmatpush1.msra.mxu0 0.0
    %211 = vmatprep.subr.mxu0 0.0
    %212 = vmatpush1.msra.mxu0 0.0
    %213 = vmatprep.subr.mxu0 0.0
    %214 = vmatpush1.msra.mxu0 0.0
    %215 = vmatprep.subr.mxu0 0.0
    %216 = vmatpush1.msra.mxu0 0.0
    %217 = vmatprep.subr.mxu0 0.0
    %218 = vmatpush1.msra.mxu0 0.0
    %219 = vmatprep.subr.mxu0 0.0
    %220 = vmatpush1.msra.mxu0 0.0
    %221 = vmatprep.subr.mxu0 0.0
    %222 = vmatpush1.msra.mxu0 0.0
    %223 = vmatprep.subr.mxu0 0.0
    %224 = vmatpush1.msra.mxu0 0.0
    %225 = vmatprep.mubr.f32.mxu0 0.0
    %226 = vmatmul.mubr.f32.gmra.mrb[0].mxu0 %v159
    %v227 = vpop.f32.mrb[0].mxu0
    %v228 = vadd.f32 %v152, %v227
    %v229 = vpop.f32.mrb[0].mxu0
    %230 = vdwg.mxu0
    %vm231 = vcmask 123904
    %232 = vst.msk [vmem:[#allocation5] sm:$0x3] %vm231, %v228
    // Predicated region
    $region10: #{tpu_custom_call.1} parent=1 // pred_check
      _
    $region11: #{tpu_custom_call.1} parent=1 // pred_check_branch
      %234 = sbr.rel (0) target = $region13
    $region12: #{tpu_custom_call.1} parent=1 // pred_region
      %s236 = ssub.s32 32, 32
      %237 = vsyncadd [#allocation4], %s236
      %s239 = sshll.u32 [#allocation5], 4
      %s240 = int_to_ptr.vmem [resolvable:$true] %s239
      %242 = dma.vmem_to_hbm [thread:$0]  %s240, 32, %s1, [#allocation4]
    $region13: #{tpu_custom_call.1} parent=1 // pred_fallthru
      _
    // Predicated region
    $region14: #{tpu_custom_call.1} parent=1 // pred_check
      _
    $region15: #{tpu_custom_call.1} parent=1 // pred_check_branch
      %244 = sbr.rel (0) target = $region17
    $region16: #{tpu_custom_call.1} parent=1 // pred_region
      %245 = dma.done [#allocation4], 32
    $region17: #{tpu_custom_call.1} parent=1 // pred_fallthru
      _
    %246 = vsyncpa [#allocation3], 1
    %247 = vsyncpa [#allocation4], 1

// kernel: tpu_custom_call.1
$region0: #{tpu_custom_call.1}
  #allocation0 [shape = 'u32[]', space=smem, size = 0x4, offset = 0x4, fixed_abs, tag = 'smem constant byte address 0x4 - core index']
  #allocation1 [shape = 'u32[144,128]{1,0:T(1,128)}', space=vmem, size = 0x12000, scoped, tag = 'internal scratch']
  %s0 = inlined_call_operand.hbm [shape: f32[2,2,8], index: 0, kind: input, shape index: {}]
  %s1 = inlined_call_operand.hbm [shape: f32[2,8], index: 1, kind: output, shape index: {0}]
  %s2 = inlined_call_operand.hbm [shape: f32[2,8], index: 2, kind: output, shape index: {1}]
  %3 = xla_tuple %s1, %s2
  %s4 = sld [smem:[#allocation0]]
  $region26: #{tpu_custom_call.1} parent=0
    _
  %s6 = ssub.s32 1, %s4
  %s7 = scalar_select 0, %s6, %s4
  $region1: #{tpu_custom_call.1} parent=0
    #allocation2 [shape = 'u8[2048]{0}', space=vmem, size = 0x800, scoped, tag = 'input window, operand 0, single buffered']
    #allocation3 [shape = 's32[1]{0}', space=sflag, size = 0x4, scoped, tag = 'scoped memory for tpu_custom_call.1']
    #allocation4 [shape = 's32[1]{0}', space=sflag, size = 0x4, scoped, tag = 'scoped memory for tpu_custom_call.1']
    #allocation5 [shape = 'u8[1024]{0}', space=vmem, size = 0x400, scoped, tag = 'output window, operand 0, single buffered']
    #allocation6 [shape = 'u8[1024]{0}', space=vmem, size = 0x400, scoped, tag = 'output window, operand 1, single buffered']
    #allocation7 [shape = 's32[1]{0}', space=sflag, size = 0x4, scoped, tag = 'scoped memory for tpu_custom_call.1']
    %8 = vsyncpa [#allocation3], 0
    %9 = vsyncpa [#allocation4], 0
    %10 = vsyncpa [#allocation7], 0
    // Predicated region
    $region2: #{tpu_custom_call.1} parent=1 // pred_check
      _
    $region3: #{tpu_custom_call.1} parent=1 // pred_check_branch
      %12 = sbr.rel (0) target = $region5
    $region4: #{tpu_custom_call.1} parent=1 // pred_region
      %s14 = ssub.s32 64, 64
      %15 = vsyncadd [#allocation3], %s14
      %s16 = sshll.u32 [#allocation2], 4
      %s17 = int_to_ptr.vmem [resolvable:$true] %s16
      %22 = dma.hbm_to_vmem [thread:$0]  %s0, 64, %s17, [#allocation3], 32, 32, 2
    $region5: #{tpu_custom_call.1} parent=1 // pred_fallthru
      _
    // Predicated region
    $region6: #{tpu_custom_call.1} parent=1 // pred_check
      _
    $region7: #{tpu_custom_call.1} parent=1 // pred_check_branch
      %24 = sbr.rel (0) target = $region9
    $region8: #{tpu_custom_call.1} parent=1 // pred_region
      %25 = dma.done [#allocation3], 64
    $region9: #{tpu_custom_call.1} parent=1 // pred_fallthru
      _
    %v26 = vld [vmem:[#allocation2] sm:$0x1]
    %v27 = vld [vmem:[#allocation2 + $0x2] sm:$0x1]
    %v28 = vld [vmem:[#allocation2 + $0x1] sm:$0x1]
    %v29 = vld [vmem:[#allocation2 + $0x3] sm:$0x1]
    %v30 = vsub.f32 %v26, %v28
    %v31 = vsub.f32 %v27, %v29
    %v32 = vand.u32 2147483647, %v30
    %v33 = vand.u32 2147483647, %v31
    %v34 = vsub.f32 0.0, %v32
    %v35 = vsub.f32 0.0, %v33
    %v36 = vmul.f32 %v34, 1.442695
    %v37 = vpow.pop %v36
    %v38 = vmul.f32 %v35, 1.442695
    %v39 = vpow.pop %v38
    %v40 = vadd.f32 %v37, 1.0
    %v41 = vadd.f32 %v39, 1.0
    %v42 = vlog2.pop %v40
    %v43 = vmul.f32 %v42, 0.6931472
    %v44 = vlog2.pop %v41
    %v45 = vmul.f32 %v44, 0.6931472
    %v46 = vmin.f32 %v30, 0.0
    %v47 = vmin.f32 %v31, 0.0
    %v48 = vsub.f32 %v46, %v43
    %v49 = vsub.f32 %v47, %v45
    %v50 = vsub.f32 0.0, %v30
    %v51 = vsub.f32 0.0, %v31
    %v52 = vmin.f32 %v50, 0.0
    %v53 = vmin.f32 %v51, 0.0
    %v54 = vsub.f32 %v52, %v43
    %v55 = vsub.f32 %v53, %v45
    %v58 = vrot.slane %v49, 7
    %vm59 = vcmask 1041409
    %v60 = vsel %vm59, %v58, %v48
    %vm62 = vcmask 58368
    %63 = vst.msk [vmem:[#allocation5] sm:$0x3] %vm62, %v60
    %v66 = vrot.slane %v55, 7
    %v67 = vsel %vm59, %v66, %v54
    %69 = vst.msk [vmem:[#allocation6] sm:$0x3] %vm62, %v67
    // Predicated region
    $region10: #{tpu_custom_call.1} parent=1 // pred_check
      _
    $region11: #{tpu_custom_call.1} parent=1 // pred_check_branch
      %71 = sbr.rel (0) target = $region13
    $region12: #{tpu_custom_call.1} parent=1 // pred_region
      %s73 = ssub.s32 32, 32
      %74 = vsyncadd [#allocation4], %s73
      %s76 = sshll.u32 [#allocation5], 4
      %s77 = int_to_ptr.vmem [resolvable:$true] %s76
      %79 = dma.vmem_to_hbm [thread:$0]  %s77, 32, %s1, [#allocation4]
    $region13: #{tpu_custom_call.1} parent=1 // pred_fallthru
      _
    // Predicated region
    $region14: #{tpu_custom_call.1} parent=1 // pred_check
      _
    $region15: #{tpu_custom_call.1} parent=1 // pred_check_branch
      %81 = sbr.rel (0) target = $region17
    $region16: #{tpu_custom_call.1} parent=1 // pred_region
      %s83 = ssub.s32 32, 32
      %84 = vsyncadd [#allocation7], %s83
      %s86 = sshll.u32 [#allocation6], 4
      %s87 = int_to_ptr.vmem [resolvable:$true] %s86
      %89 = dma.vmem_to_hbm [thread:$0]  %s87, 32, %s2, [#allocation7]
    $region17: #{tpu_custom_call.1} parent=1 // pred_fallthru
      _
    // Predicated region
    $region18: #{tpu_custom_call.1} parent=1 // pred_check
      _
    $region19: #{tpu_custom_call.1} parent=1 // pred_check_branch
      %91 = sbr.rel (0) target = $region21
    $region20: #{tpu_custom_call.1} parent=1 // pred_region
      %92 = dma.done [#allocation4], 32
    $region21: #{tpu_custom_call.1} parent=1 // pred_fallthru
      _
    // Predicated region
    $region22: #{tpu_custom_call.1} parent=1 // pred_check
      _
    $region23: #{tpu_custom_call.1} parent=1 // pred_check_branch
      %94 = sbr.rel (0) target = $region25
    $region24: #{tpu_custom_call.1} parent=1 // pred_region
      %95 = dma.done [#allocation7], 32
    $region25: #{tpu_custom_call.1} parent=1 // pred_fallthru
      _
    %96 = vsyncpa [#allocation3], 1
    %97 = vsyncpa [#allocation4], 1
    %98 = vsyncpa [#allocation7], 1

</llo_original>
